<compile_context>
chip_gen: v7x
topology: tpu7x:2x2x1
jax: 0.10.0
libtpu: 0.0.40
codegen_flags: <defaults>
</compile_context>

<pallas_src>
import functools
import math

import numpy as np
import jax
import jax.numpy as jnp
from jax.experimental import pallas as pl
from jax.experimental.pallas import tpu as pltpu


_OUT_LANES = 8                 # compact per-sample-loss writeback width
_VMEM_BUDGET = 24 * 2 ** 20    # conservative buffer budget (safe on v5e/v6e/v7x)
_VMEM_LIMIT = 32 * 2 ** 20     # explicit scoped-VMEM limit (< v7x 64 MiB physical)


def _round_up(n, m):
    return ((n + m - 1) // m) * m


# --------------------------------------------------------------------------- #
# pltpu.roll direction probe (one tiny kernel, run once, cached).              #
# --------------------------------------------------------------------------- #
@functools.lru_cache(maxsize=1)
def _roll_matches_jnp_convention():
    """True iff pltpu.roll(x, s, axis=-1)[..., i] == x[..., (i - s) % n]."""
    def kern(x_ref, o_ref):
        o_ref[...] = pltpu.roll(x_ref[...], shift=1, axis=-1)

    x = jnp.broadcast_to(jax.lax.iota(jnp.float32, 128)[None, :], (8, 128))
    y = pl.pallas_call(kern, out_shape=jax.ShapeDtypeStruct((8, 128), jnp.float32))(x)
    return bool(np.asarray(jax.block_until_ready(y))[0, 1] == 0.0)


def _basis_block_spec(shape, index_map, single_buffer):
    """Grid-constant basis block; single-buffer it when supported (saves VMEM)."""
    if single_buffer:
        try:
            return pl.BlockSpec(shape, index_map, pipeline_mode=pl.Buffered(1))
        except TypeError:           # older Pallas without pipeline_mode
            pass
    return pl.BlockSpec(shape, index_map)


# --------------------------------------------------------------------------- #
# In-kernel math (shared by the fused and L-chunked kernels).                  #
# --------------------------------------------------------------------------- #
def _normalized_band_psd(y, *, k, packed, roll_shift):
    """y: (TB, W) f32 real/imag DFT coeffs -> normalized pass-band PSD, zero padding."""
    p = y * y
    if packed:
        # lanes [0:K] = Re^2, lanes [K:2K] = Im^2 -> fold Im^2 onto the Re^2 lanes.
        p = p + pltpu.roll(p, shift=roll_shift, axis=-1)           # XLU slot, ~free
        lane = jax.lax.broadcasted_iota(jnp.int32, p.shape, 1)
        p = jnp.where(lane < k, p, 0.0)
    else:
        half = p.shape[-1] // 2                                    # vreg-aligned slices
        p = p[:, :half] + p[:, half:]                              # zero beyond K already
    s = jnp.sum(p, axis=-1, keepdims=True)                         # band power (TB, 1)
    # Reference produces NaN for an all-zero band power; guard so zero-padded rows
    # stay finite (they are sliced away in the wrapper).
    s = jnp.where(s > 0.0, s, 1.0)
    r = pl.reciprocal(s, approx=True)                              # EUP slot
    r = r * (2.0 - s * r)                                          # one Newton step -> ~f32
    return p * r


def _mse_loss(y1, y2, *, k, packed, roll_shift, inv_k):
    q1 = _normalized_band_psd(y1, k=k, packed=packed, roll_shift=roll_shift)
    q2 = _normalized_band_psd(y2, k=k, packed=packed, roll_shift=roll_shift)
    d = q1 - q2
    return jnp.sum(d * d, axis=-1, keepdims=True) * inv_k          # MSE over the TRUE K bins


def _fal_fused_kernel(x1_ref, x2_ref, basis_ref, out_ref, *,
                      k, packed, roll_shift, inv_k):
    b = basis_ref[...]
    y1 = jnp.dot(x1_ref[...], b, preferred_element_type=jnp.float32)
    y2 = jnp.dot(x2_ref[...], b, preferred_element_type=jnp.float32)
    loss = _mse_loss(y1, y2, k=k, packed=packed, roll_shift=roll_shift, inv_k=inv_k)
    out_ref[...] = jnp.broadcast_to(loss, out_ref.shape)


def _fal_chunked_kernel(x1_ref, x2_ref, basis_ref, out_ref, acc1_ref, acc2_ref, *,
                        k, packed, roll_shift, inv_k):
    l = pl.program_id(1)

    @pl.when(l == 0)
    def _():
        acc1_ref[...] = jnp.zeros_like(acc1_ref)
        acc2_ref[...] = jnp.zeros_like(acc2_ref)

    b = basis_ref[...]
    acc1_ref[...] += jnp.dot(x1_ref[...], b, preferred_element_type=jnp.float32)
    acc2_ref[...] += jnp.dot(x2_ref[...], b, preferred_element_type=jnp.float32)

    @pl.when(l == pl.num_programs(1) - 1)
    def _():
        loss = _mse_loss(acc1_ref[...], acc2_ref[...], k=k, packed=packed,
                         roll_shift=roll_shift, inv_k=inv_k)
        out_ref[...] = jnp.broadcast_to(loss, out_ref.shape)


# --------------------------------------------------------------------------- #
# Builder.                                                                     #
# --------------------------------------------------------------------------- #
def make_fal(Fs, L, high_pass=40, low_pass=240, *, block_b=512, l_chunk=2048,
             compute_dtype=jnp.float32):
    """Build FAL for length-L signals sampled at Fs Hz.

    Returns (fal, fal_per_sample):
      fal(x1, x2)            -> scalar loss for one pair (matches the PyTorch module)
      fal_per_sample(x1, x2) -> (B,) losses for batched pairs of shape (B, L)

    compute_dtype=jnp.bfloat16 is recommended on v5e/v6e (f32 MXU accumulation is
    kept; expect ~1-3% loss quantization).
    """
    # ---- pass-band bins (same convention as the PyTorch module; exact rfft bin
    #      frequencies for even L) ----
    n_bins = L // 2 + 1
    freqs = np.linspace(0.0, Fs / 2.0, n_bins)
    use = np.logical_and(freqs >= high_pass / 60.0, freqs <= low_pass / 60.0)
    k_idx = np.nonzero(use)[0].astype(np.float64)
    K = int(k_idx.shape[0])
    assert K > 0, "pass-band selects no frequency bins"

    # ---- packed single-128-lane [cos | -sin] layout when it fits ----
    packed = (2 * K <= 128)
    roll_shift = 0
    if packed:
        try:
            roll_shift = (128 - K) % 128 if _roll_matches_jnp_convention() else K
        except Exception:
            packed = False                      # fall back to the two-half layout
    if packed:
        W, im_off = 128, K
    else:
        Kp = max(128, _round_up(K, 128))
        W, im_off = 2 * Kp, Kp

    # ---- L-chunking (reduction grid axis) for long signals ----
    l_chunk = max(128, _round_up(l_chunk, 128))
    if L <= l_chunk:
        TL, Lp, n_l = L, L, 1
    else:
        TL = l_chunk
        Lp = _round_up(L, TL)
        n_l = Lp // TL

    # ---- host-precomputed real-DFT basis (norm='forward', band bins only,
    #      mean-centering folded in, zero-padded to (Lp, W)) ----
    n = np.arange(L, dtype=np.float64)
    ang = 2.0 * math.pi * np.outer(n, k_idx) / L
    ct = np.cos(ang) / L
    st = -np.sin(ang) / L
    ct -= ct.mean(axis=0, keepdims=True)        # `x - mean(x)` folded into the basis
    st -= st.mean(axis=0, keepdims=True)
    basis = np.zeros((Lp, W), dtype=np.float64)
    basis[:L, :K] = ct
    basis[:L, im_off:im_off + K] = st
    basis_j = jnp.asarray(basis, dtype=compute_dtype)
    in_isz = np.dtype(compute_dtype).itemsize

    # ---- VMEM-budgeted tile size (v7x: 64 MiB physical / 32 MiB scoped) ----
    block_b = max(8, _round_up(block_b, 8))
    per_tb = 2 * 2 * TL * in_isz + 2 * _OUT_LANES * 4 + (2 * W * 4 if n_l > 1 else 0)
    fixed = (2 if n_l > 1 else 1) * TL * W * in_isz
    max_tb = max(8, ((_VMEM_BUDGET - fixed) // per_tb) // 8 * 8)
    block_b = min(block_b, max_tb)

    kern_kwargs = dict(k=K, packed=packed, roll_shift=roll_shift, inv_k=float(1.0 / K))
    fused_kernel = functools.partial(_fal_fused_kernel, **kern_kwargs)
    chunked_kernel = functools.partial(_fal_chunked_kernel, **kern_kwargs)

    state = {"basis_single_buffer": True}       # disabled lazily if unsupported

    def _cost(bp):
        return pl.CostEstimate(
            flops=int(4 * bp * Lp * W),
            bytes_accessed=int(2 * bp * Lp * in_isz + Lp * W * in_isz
                               + bp * _OUT_LANES * 4),
            transcendentals=int(2 * bp))

    def _call_single(x1, x2):
        return pl.pallas_call(
            fused_kernel,
            out_shape=jax.ShapeDtypeStruct((x1.shape[0], _OUT_LANES), jnp.float32),
            compiler_params=pltpu.CompilerParams(vmem_limit_bytes=_VMEM_LIMIT),
            cost_estimate=_cost(x1.shape[0]),
        )(x1, x2, basis_j)

    def _call_fused_grid(x1, x2, G, TB, single_buffer):
        return pl.pallas_call(
            fused_kernel,
            out_shape=jax.ShapeDtypeStruct((G * TB, _OUT_LANES), jnp.float32),
            grid=(G,),
            in_specs=[pl.BlockSpec((TB, Lp), lambda g: (g, 0)),
                      pl.BlockSpec((TB, Lp), lambda g: (g, 0)),
                      _basis_block_spec((Lp, W), lambda g: (0, 0), single_buffer)],
            out_specs=pl.BlockSpec((TB, _OUT_LANES), lambda g: (g, 0)),
            compiler_params=pltpu.CompilerParams(
                dimension_semantics=("parallel",),
                vmem_limit_bytes=_VMEM_LIMIT),
            cost_estimate=_cost(G * TB),
        )(x1, x2, basis_j)

    def _call_chunked_grid(x1, x2, G, TB):
        return pl.pallas_call(
            chunked_kernel,
            out_shape=jax.ShapeDtypeStruct((G * TB, _OUT_LANES), jnp.float32),
            grid=(G, n_l),
            in_specs=[pl.BlockSpec((TB, TL), lambda g, l: (g, l)),
                      pl.BlockSpec((TB, TL), lambda g, l: (g, l)),
                      pl.BlockSpec((TL, W), lambda g, l: (l, 0))],
            out_specs=pl.BlockSpec((TB, _OUT_LANES), lambda g, l: (g, 0)),
            scratch_shapes=[pltpu.VMEM((TB, W), jnp.float32),
                            pltpu.VMEM((TB, W), jnp.float32)],
            compiler_params=pltpu.CompilerParams(
                dimension_semantics=("parallel", "arbitrary"),
                vmem_limit_bytes=_VMEM_LIMIT),
            cost_estimate=_cost(G * TB),
        )(x1, x2, basis_j)

    def fal_per_sample(pos_rppg1, pos_rppg2):
        x1 = jnp.asarray(pos_rppg1, compute_dtype).reshape(-1, L)
        x2 = jnp.asarray(pos_rppg2, compute_dtype).reshape(-1, L)
        B = x1.shape[0]
        TB = min(block_b, _round_up(B, 8))
        Bp = _round_up(B, TB)
        G = Bp // TB
        if Bp != B:      # only copies when B isn't already a multiple of the tile size
            x1 = jnp.pad(x1, ((0, Bp - B), (0, 0)))
            x2 = jnp.pad(x2, ((0, Bp - B), (0, 0)))
        if Lp != L:      # long-signal path: zero-pad the time axis to the chunk grid
            x1 = jnp.pad(x1, ((0, 0), (0, Lp - L)))
            x2 = jnp.pad(x2, ((0, 0), (0, Lp - L)))

        if n_l > 1:
            out = _call_chunked_grid(x1, x2, G, TB)
        elif G == 1:
            out = _call_single(x1, x2)
        else:
            if state["basis_single_buffer"]:
                try:
                    out = _call_fused_grid(x1, x2, G, TB, True)
                except Exception:
                    state["basis_single_buffer"] = False
                    out = _call_fused_grid(x1, x2, G, TB, False)
            else:
                out = _call_fused_grid(x1, x2, G, TB, False)
        return out[:B, 0]

    def fal(pos_rppg1, pos_rppg2):
        return fal_per_sample(jnp.asarray(pos_rppg1).reshape(1, L),
                              jnp.asarray(pos_rppg2).reshape(1, L))[0]

    return fal, fal_per_sample


# --------------------------------------------------------------------------- #
# Plain-JAX mirror of the PyTorch module, for verification.                    #
# --------------------------------------------------------------------------- #
def _reference_fal(x1, x2, Fs, high_pass=40, low_pass=240):
    def norm_psd(x):
        x = x - jnp.mean(x, axis=-1, keepdims=True)
        X = jnp.fft.rfft(x) / x.shape[-1]                   # norm='forward'
        p = jnp.real(X) ** 2 + jnp.imag(X) ** 2
        f = np.linspace(0.0, Fs / 2.0, p.shape[0])
        keep = np.logical_and(f >= high_pass / 60.0, f <= low_pass / 60.0)
        p = p[np.nonzero(keep)[0]]
        return p / jnp.sum(p)

    p1 = norm_psd(x1)
    p2 = norm_psd(x2)
    return jnp.mean((p1 - p2) ** 2)


if __name__ == "__main__":
    Fs = 30.0
    L = 128

    # ---- default config: f32 compute, packed 128-lane basis, fat tiles ----
    fal, fal_per_sample = make_fal(Fs, L)

    key = jax.random.PRNGKey(0)
    k1, k2, k3, k4, k5, k6 = jax.random.split(key, 6)

    # single pair (module semantics): scalar loss
    x1 = jax.random.normal(k1, (L,), dtype=jnp.float32)
    x2 = jax.random.normal(k2, (L,), dtype=jnp.float32)
    loss = jax.block_until_ready(fal(x1, x2))
    ref = _reference_fal(x1, x2, Fs)
    assert np.allclose(np.asarray(loss), np.asarray(ref), rtol=1e-3, atol=1e-6), (
        float(loss), float(ref))

    # batched pairs with the default config (single fused tile)
    B = 20
    xb1 = jax.random.normal(k3, (B, L), dtype=jnp.float32)
    xb2 = jax.random.normal(k4, (B, L), dtype=jnp.float32)
    refs = np.asarray(jax.vmap(lambda a, b: _reference_fal(a, b, Fs))(xb1, xb2))
    losses = np.asarray(jax.block_until_ready(fal_per_sample(xb1, xb2)))
    assert np.allclose(losses, refs, rtol=1e-3, atol=1e-6), (losses, refs)

    # tiny-tile instance ONLY to exercise the multi-tile "parallel" grid code path
    _, fal_ps_grid = make_fal(Fs, L, block_b=8)
    losses_g = np.asarray(jax.block_until_ready(fal_ps_grid(xb1, xb2)))
    assert np.allclose(losses_g, refs, rtol=1e-3, atol=1e-6), (losses_g, refs)

    # bf16-input instance (recommended on v5e/v6e); matmul quantization ~1-3%
    _, fal_ps_bf16 = make_fal(Fs, L, compute_dtype=jnp.bfloat16)
    losses_bf = np.asarray(jax.block_until_ready(fal_ps_bf16(xb1, xb2)))
    assert np.allclose(losses_bf, refs, rtol=1e-1, atol=1e-5), (losses_bf, refs)

    # long-signal instance: 2K > 128 (two-half basis) + L-reduction "arbitrary" axis
    L2, B2 = 1024, 12
    xc1 = jax.random.normal(k5, (B2, L2), dtype=jnp.float32)
    xc2 = jax.random.normal(k6, (B2, L2), dtype=jnp.float32)
    _, fal_ps_long = make_fal(Fs, L2, block_b=8, l_chunk=256)
    losses_c = np.asarray(jax.block_until_ready(fal_ps_long(xc1, xc2)))
    refs_c = np.asarray(jax.vmap(lambda a, b: _reference_fal(a, b, Fs))(xc1, xc2))
    assert np.allclose(losses_c, refs_c, rtol=1e-3, atol=1e-6), (losses_c, refs_c)

    print("KERNEL_OK")
</pallas_src>

<mosaic_0001>
module attributes {stable_mosaic.version = 11 : i64} {
  func.func @_fal_fused_kernel(%arg0: memref<8x128xf32, #tpu.memory_space<vmem>>, %arg1: memref<8x128xf32, #tpu.memory_space<vmem>>, %arg2: memref<128x256xf32, #tpu.memory_space<vmem>>, %arg3: memref<8x8xf32, #tpu.memory_space<vmem>>) attributes {dimension_semantics = [], scalar_prefetch = 0 : i64, scratch_operands = 0 : i64, tpu.core_type = #tpu.core_type<tc>} {
    %c0 = arith.constant 0 : index
    %c0_0 = arith.constant 0 : index
    %0 = vector.load %arg2[%c0, %c0_0] : memref<128x256xf32, #tpu.memory_space<vmem>>, vector<128x256xf32>
    %c0_1 = arith.constant 0 : index
    %c0_2 = arith.constant 0 : index
    %1 = vector.load %arg0[%c0_1, %c0_2] : memref<8x128xf32, #tpu.memory_space<vmem>>, vector<8x128xf32>
    %cst = arith.constant dense<0.000000e+00> : vector<8x256xf32>
    %2 = tpu.matmul %1, %0, %cst {dimension_numbers = #tpu.dot_dimension_numbers<[1], [0], [0], [1], [0, 0, 1, 1], [], []>} : vector<8x128xf32>, vector<128x256xf32>, vector<8x256xf32> -> vector<8x256xf32>
    %c0_3 = arith.constant 0 : index
    %c0_4 = arith.constant 0 : index
    %3 = vector.load %arg1[%c0_3, %c0_4] : memref<8x128xf32, #tpu.memory_space<vmem>>, vector<8x128xf32>
    %cst_5 = arith.constant dense<0.000000e+00> : vector<8x256xf32>
    %4 = tpu.matmul %3, %0, %cst_5 {dimension_numbers = #tpu.dot_dimension_numbers<[1], [0], [0], [1], [0, 0, 1, 1], [], []>} : vector<8x128xf32>, vector<128x256xf32>, vector<8x256xf32> -> vector<8x256xf32>
    %5 = arith.mulf %2, %2 : vector<8x256xf32>
    %6 = vector.extract_strided_slice %5 {offsets = [0, 0], sizes = [8, 128], strides = [1, 1]} : vector<8x256xf32> to vector<8x128xf32>
    %7 = vector.extract_strided_slice %5 {offsets = [0, 128], sizes = [8, 128], strides = [1, 1]} : vector<8x256xf32> to vector<8x128xf32>
    %8 = arith.addf %6, %7 : vector<8x128xf32>
    %cst_6 = arith.constant dense<0.000000e+00> : vector<8xf32>
    %9 = vector.multi_reduction <add>, %8, %cst_6 [1] : vector<8x128xf32> to vector<8xf32>
    %10 = vector.shape_cast %9 : vector<8xf32> to vector<8x1xf32>
    %cst_7 = arith.constant 0.000000e+00 : f32
    %11 = vector.broadcast %cst_7 : f32 to vector<8x1xf32>
    %12 = arith.cmpf ogt, %10, %11 : vector<8x1xf32>
    %cst_8 = arith.constant 1.000000e+00 : f32
    %13 = vector.broadcast %cst_8 : f32 to vector<8x1xf32>
    %14 = arith.select %12, %10, %13 : vector<8x1xi1>, vector<8x1xf32>
    %15 = tpu.reciprocal %14 {approx = true} : vector<8x1xf32> -> vector<8x1xf32>
    %16 = arith.mulf %14, %15 : vector<8x1xf32>
    %cst_9 = arith.constant 2.000000e+00 : f32
    %17 = vector.broadcast %cst_9 : f32 to vector<8x1xf32>
    %18 = arith.subf %17, %16 : vector<8x1xf32>
    %19 = arith.mulf %15, %18 : vector<8x1xf32>
    %20 = vector.broadcast %19 : vector<8x1xf32> to vector<8x128xf32>
    %21 = arith.mulf %8, %20 : vector<8x128xf32>
    %22 = arith.mulf %4, %4 : vector<8x256xf32>
    %23 = vector.extract_strided_slice %22 {offsets = [0, 0], sizes = [8, 128], strides = [1, 1]} : vector<8x256xf32> to vector<8x128xf32>
    %24 = vector.extract_strided_slice %22 {offsets = [0, 128], sizes = [8, 128], strides = [1, 1]} : vector<8x256xf32> to vector<8x128xf32>
    %25 = arith.addf %23, %24 : vector<8x128xf32>
    %cst_10 = arith.constant dense<0.000000e+00> : vector<8xf32>
    %26 = vector.multi_reduction <add>, %25, %cst_10 [1] : vector<8x128xf32> to vector<8xf32>
    %27 = vector.shape_cast %26 : vector<8xf32> to vector<8x1xf32>
    %cst_11 = arith.constant 0.000000e+00 : f32
    %28 = vector.broadcast %cst_11 : f32 to vector<8x1xf32>
    %29 = arith.cmpf ogt, %27, %28 : vector<8x1xf32>
    %cst_12 = arith.constant 1.000000e+00 : f32
    %30 = vector.broadcast %cst_12 : f32 to vector<8x1xf32>
    %31 = arith.select %29, %27, %30 : vector<8x1xi1>, vector<8x1xf32>
    %32 = tpu.reciprocal %31 {approx = true} : vector<8x1xf32> -> vector<8x1xf32>
    %33 = arith.mulf %31, %32 : vector<8x1xf32>
    %cst_13 = arith.constant 2.000000e+00 : f32
    %34 = vector.broadcast %cst_13 : f32 to vector<8x1xf32>
    %35 = arith.subf %34, %33 : vector<8x1xf32>
    %36 = arith.mulf %32, %35 : vector<8x1xf32>
    %37 = vector.broadcast %36 : vector<8x1xf32> to vector<8x128xf32>
    %38 = arith.mulf %25, %37 : vector<8x128xf32>
    %39 = arith.subf %21, %38 : vector<8x128xf32>
    %40 = arith.mulf %39, %39 : vector<8x128xf32>
    %cst_14 = arith.constant dense<0.000000e+00> : vector<8xf32>
    %41 = vector.multi_reduction <add>, %40, %cst_14 [1] : vector<8x128xf32> to vector<8xf32>
    %42 = vector.shape_cast %41 : vector<8xf32> to vector<8x1xf32>
    %cst_15 = arith.constant 0.0666666701 : f32
    %43 = vector.broadcast %cst_15 : f32 to vector<8x1xf32>
    %44 = arith.mulf %42, %43 : vector<8x1xf32>
    %45 = vector.shape_cast %44 : vector<8x1xf32> to vector<8x1xf32>
    %46 = vector.broadcast %45 : vector<8x1xf32> to vector<8x8xf32>
    %c0_16 = arith.constant 0 : index
    %c0_17 = arith.constant 0 : index
    %47 = vector.load %arg3[%c0_16, %c0_17] : memref<8x8xf32, #tpu.memory_space<vmem>>, vector<8x8xf32>
    tpu.vector_store %arg3[%c0_16, %c0_17], %46 {strides = array<i32>} : memref<8x8xf32, #tpu.memory_space<vmem>>, vector<8x8xf32>,
    return
  }
}

</mosaic_0001>

<llo_original>
// kernel: tpu_custom_call.1
$region0: #{tpu_custom_call.1}
  #allocation0 [shape = 'u32[]', space=smem, size = 0x4, offset = 0x4, fixed_abs, tag = 'smem constant byte address 0x4 - core index']
  #allocation1 [shape = 'u32[144,128]{1,0:T(1,128)}', space=vmem, size = 0x12000, scoped, tag = 'internal scratch']
  %s0 = inlined_call_operand.hbm [shape: f32[8,128], index: 0, kind: input, shape index: {}]
  %s1 = inlined_call_operand.hbm [shape: f32[8,128], index: 1, kind: input, shape index: {}]
  %s2 = inlined_call_operand.hbm [shape: f32[128,256], index: 2, kind: input, shape index: {}]
  %s3 = inlined_call_operand.hbm [shape: f32[8,8], index: 3, kind: output, shape index: {}]
  %s4 = sld [smem:[#allocation0]]
  $region34: #{tpu_custom_call.1} parent=0
    _
  %s6 = ssub.s32 1, %s4
  %s7 = scalar_select 0, %s6, %s4
  $region1: #{tpu_custom_call.1} parent=0
    #allocation2 [shape = 'u8[4096]{0}', space=vmem, size = 0x1000, scoped, tag = 'input window, operand 0, single buffered']
    #allocation3 [shape = 's32[1]{0}', space=sflag, size = 0x4, scoped, tag = 'scoped memory for tpu_custom_call.1']
    #allocation4 [shape = 's32[1]{0}', space=sflag, size = 0x4, scoped, tag = 'scoped memory for tpu_custom_call.1']
    #allocation5 [shape = 'u8[4096]{0}', space=vmem, size = 0x1000, scoped, tag = 'input window, operand 1, single buffered']
    #allocation6 [shape = 's32[1]{0}', space=sflag, size = 0x4, scoped, tag = 'scoped memory for tpu_custom_call.1']
    #allocation7 [shape = 'u8[131072]{0}', space=vmem, size = 0x20000, scoped, tag = 'input window, operand 2, single buffered']
    #allocation8 [shape = 'u8[4096]{0}', space=vmem, size = 0x1000, scoped, tag = 'output window, operand 0, single buffered']
    %8 = vsyncpa [#allocation3], 0
    %9 = vsyncpa [#allocation6], 0
    %10 = vsyncpa [#allocation4], 0
    // Predicated region
    $region2: #{tpu_custom_call.1} parent=1 // pred_check
      _
    $region3: #{tpu_custom_call.1} parent=1 // pred_check_branch
      %12 = sbr.rel (0) target = $region5
    $region4: #{tpu_custom_call.1} parent=1 // pred_region
      %s14 = ssub.s32 128, 128
      %15 = vsyncadd [#allocation3], %s14
      %s17 = sshll.u32 [#allocation2], 4
      %s18 = int_to_ptr.vmem [resolvable:$true] %s17
      %20 = dma.hbm_to_vmem [thread:$0]  %s0, 128, %s18, [#allocation3]
    $region5: #{tpu_custom_call.1} parent=1 // pred_fallthru
      _
    // Predicated region
    $region6: #{tpu_custom_call.1} parent=1 // pred_check
      _
    $region7: #{tpu_custom_call.1} parent=1 // pred_check_branch
      %22 = sbr.rel (0) target = $region9
    $region8: #{tpu_custom_call.1} parent=1 // pred_region
      %s24 = ssub.s32 128, 128
      %25 = vsyncadd [#allocation6], %s24
      %s27 = sshll.u32 [#allocation5], 4
      %s28 = int_to_ptr.vmem [resolvable:$true] %s27
      %30 = dma.hbm_to_vmem [thread:$0]  %s1, 128, %s28, [#allocation6]
    $region9: #{tpu_custom_call.1} parent=1 // pred_fallthru
      _
    // Predicated region
    $region10: #{tpu_custom_call.1} parent=1 // pred_check
      _
    $region11: #{tpu_custom_call.1} parent=1 // pred_check_branch
      %32 = sbr.rel (0) target = $region13
    $region12: #{tpu_custom_call.1} parent=1 // pred_region
      %s34 = ssub.s32 4096, 4096
      %35 = vsyncadd [#allocation6], %s34
      %s36 = sshll.u32 [#allocation7], 4
      %s37 = int_to_ptr.vmem [resolvable:$true] %s36
      %42 = dma.hbm_to_vmem [thread:$0]  %s2, 4096, %s37, [#allocation6], 256, 256, 16
    $region13: #{tpu_custom_call.1} parent=1 // pred_fallthru
      _
    // Predicated region
    $region14: #{tpu_custom_call.1} parent=1 // pred_check
      _
    $region15: #{tpu_custom_call.1} parent=1 // pred_check_branch
      %44 = sbr.rel (0) target = $region17
    $region16: #{tpu_custom_call.1} parent=1 // pred_region
      %45 = dma.done [#allocation3], 128
    $region17: #{tpu_custom_call.1} parent=1 // pred_fallthru
      _
    // Predicated region
    $region18: #{tpu_custom_call.1} parent=1 // pred_check
      _
    $region19: #{tpu_custom_call.1} parent=1 // pred_check_branch
      %47 = sbr.rel (0) target = $region21
    $region20: #{tpu_custom_call.1} parent=1 // pred_region
      %48 = dma.done [#allocation6], 128
    $region21: #{tpu_custom_call.1} parent=1 // pred_fallthru
      _
    // Predicated region
    $region22: #{tpu_custom_call.1} parent=1 // pred_check
      _
    $region23: #{tpu_custom_call.1} parent=1 // pred_check_branch
      %50 = sbr.rel (0) target = $region25
    $region24: #{tpu_custom_call.1} parent=1 // pred_region
      %51 = dma.done [#allocation6], 4096
    $region25: #{tpu_custom_call.1} parent=1 // pred_fallthru
      _
    %v52 = vld [vmem:[#allocation7] sm:$0xff]
    %v53 = vld [vmem:[#allocation7 + $0x8] sm:$0xff]
    %v54 = vld [vmem:[#allocation7 + $0x10] sm:$0xff]
    %v55 = vld [vmem:[#allocation7 + $0x18] sm:$0xff]
    %v56 = vld [vmem:[#allocation7 + $0x20] sm:$0xff]
    %v57 = vld [vmem:[#allocation7 + $0x28] sm:$0xff]
    %v58 = vld [vmem:[#allocation7 + $0x30] sm:$0xff]
    %v59 = vld [vmem:[#allocation7 + $0x38] sm:$0xff]
    %v60 = vld [vmem:[#allocation7 + $0x40] sm:$0xff]
    %v61 = vld [vmem:[#allocation7 + $0x48] sm:$0xff]
    %v62 = vld [vmem:[#allocation7 + $0x50] sm:$0xff]
    %v63 = vld [vmem:[#allocation7 + $0x58] sm:$0xff]
    %v64 = vld [vmem:[#allocation7 + $0x60] sm:$0xff]
    %v65 = vld [vmem:[#allocation7 + $0x68] sm:$0xff]
    %v66 = vld [vmem:[#allocation7 + $0x70] sm:$0xff]
    %v67 = vld [vmem:[#allocation7 + $0x78] sm:$0xff]
    %v68 = vld [vmem:[#allocation7 + $0x80] sm:$0xff]
    %v69 = vld [vmem:[#allocation7 + $0x88] sm:$0xff]
    %v70 = vld [vmem:[#allocation7 + $0x90] sm:$0xff]
    %v71 = vld [vmem:[#allocation7 + $0x98] sm:$0xff]
    %v72 = vld [vmem:[#allocation7 + $0xa0] sm:$0xff]
    %v73 = vld [vmem:[#allocation7 + $0xa8] sm:$0xff]
    %v74 = vld [vmem:[#allocation7 + $0xb0] sm:$0xff]
    %v75 = vld [vmem:[#allocation7 + $0xb8] sm:$0xff]
    %v76 = vld [vmem:[#allocation7 + $0xc0] sm:$0xff]
    %v77 = vld [vmem:[#allocation7 + $0xc8] sm:$0xff]
    %v78 = vld [vmem:[#allocation7 + $0xd0] sm:$0xff]
    %v79 = vld [vmem:[#allocation7 + $0xd8] sm:$0xff]
    %v80 = vld [vmem:[#allocation7 + $0xe0] sm:$0xff]
    %v81 = vld [vmem:[#allocation7 + $0xe8] sm:$0xff]
    %v82 = vld [vmem:[#allocation7 + $0xf0] sm:$0xff]
    %v83 = vld [vmem:[#allocation7 + $0xf8] sm:$0xff]
    %v84 = vld [vmem:[#allocation2] sm:$0xff]
    %85 = vmatprep.subr.mxu0 %v53
    %86 = vmatpush1.msra.mxu0 %v52
    %87 = vmatprep.subr.mxu0 %v55
    %88 = vmatpush1.msra.mxu0 %v54
    %89 = vmatprep.subr.mxu0 %v57
    %90 = vmatpush1.msra.mxu0 %v56
    %91 = vmatprep.subr.mxu0 %v59
    %92 = vmatpush1.msra.mxu0 %v58
    %93 = vmatprep.subr.mxu0 %v61
    %94 = vmatpush1.msra.mxu0 %v60
    %95 = vmatprep.subr.mxu0 %v63
    %96 = vmatpush1.msra.mxu0 %v62
    %97 = vmatprep.subr.mxu0 %v65
    %98 = vmatpush1.msra.mxu0 %v64
    %99 = vmatprep.subr.mxu0 %v67
    %100 = vmatpush1.msra.mxu0 %v66
    %101 = vmatprep.subr.mxu0 %v69
    %102 = vmatpush1.msra.mxu0 %v68
    %103 = vmatprep.subr.mxu0 %v71
    %104 = vmatpush1.msra.mxu0 %v70
    %105 = vmatprep.subr.mxu0 %v73
    %106 = vmatpush1.msra.mxu0 %v72
    %107 = vmatprep.subr.mxu0 %v75
    %108 = vmatpush1.msra.mxu0 %v74
    %109 = vmatprep.subr.mxu0 %v77
    %110 = vmatpush1.msra.mxu0 %v76
    %111 = vmatprep.subr.mxu0 %v79
    %112 = vmatpush1.msra.mxu0 %v78
    %113 = vmatprep.subr.mxu0 %v81
    %114 = vmatpush1.msra.mxu0 %v80
    %115 = vmatprep.subr.mxu0 %v83
    %116 = vmatpush1.msra.mxu0 %v82
    %117 = vmatprep.subr.mxu0 0.0
    %118 = vmatpush1.msra.mxu0 0.0
    %119 = vmatprep.subr.mxu0 0.0
    %120 = vmatpush1.msra.mxu0 0.0
    %121 = vmatprep.subr.mxu0 0.0
    %122 = vmatpush1.msra.mxu0 0.0
    %123 = vmatprep.subr.mxu0 0.0
    %124 = vmatpush1.msra.mxu0 0.0
    %125 = vmatprep.subr.mxu0 0.0
    %126 = vmatpush1.msra.mxu0 0.0
    %127 = vmatprep.subr.mxu0 0.0
    %128 = vmatpush1.msra.mxu0 0.0
    %129 = vmatprep.subr.mxu0 0.0
    %130 = vmatpush1.msra.mxu0 0.0
    %131 = vmatprep.subr.mxu0 0.0
    %132 = vmatpush1.msra.mxu0 0.0
    %133 = vmatprep.subr.mxu0 0.0
    %134 = vmatpush1.msra.mxu0 0.0
    %135 = vmatprep.subr.mxu0 0.0
    %136 = vmatpush1.msra.mxu0 0.0
    %137 = vmatprep.subr.mxu0 0.0
    %138 = vmatpush1.msra.mxu0 0.0
    %139 = vmatprep.subr.mxu0 0.0
    %140 = vmatpush1.msra.mxu0 0.0
    %141 = vmatprep.subr.mxu0 0.0
    %142 = vmatpush1.msra.mxu0 0.0
    %143 = vmatprep.subr.mxu0 0.0
    %144 = vmatpush1.msra.mxu0 0.0
    %145 = vmatprep.subr.mxu0 0.0
    %146 = vmatpush1.msra.mxu0 0.0
    %147 = vmatprep.subr.mxu0 0.0
    %148 = vmatpush1.msra.mxu0 0.0
    %149 = vmatprep.mubr.f32.mxu0 0.0
    %150 = vmatmul.mubr.f32.gmra.mrb[0].mxu0 %v84
    %v151 = vpop.f32.mrb[0].mxu0
    %v152 = vadd.f32 0.0, %v151
    %v153 = vpop.f32.mrb[0].mxu0
    %v154 = vadd.f32 0.0, %v153
    %155 = vdwg.mxu0
    %v156 = vld [vmem:[#allocation5] sm:$0xff]
    %157 = vmatprep.subr.mxu0 %v53
    %158 = vmatpush1.msra.mxu0 %v52
    %159 = vmatprep.subr.mxu0 %v55
    %160 = vmatpush1.msra.mxu0 %v54
    %161 = vmatprep.subr.mxu0 %v57
    %162 = vmatpush1.msra.mxu0 %v56
    %163 = vmatprep.subr.mxu0 %v59
    %164 = vmatpush1.msra.mxu0 %v58
    %165 = vmatprep.subr.mxu0 %v61
    %166 = vmatpush1.msra.mxu0 %v60
    %167 = vmatprep.subr.mxu0 %v63
    %168 = vmatpush1.msra.mxu0 %v62
    %169 = vmatprep.subr.mxu0 %v65
    %170 = vmatpush1.msra.mxu0 %v64
    %171 = vmatprep.subr.mxu0 %v67
    %172 = vmatpush1.msra.mxu0 %v66
    %173 = vmatprep.subr.mxu0 %v69
    %174 = vmatpush1.msra.mxu0 %v68
    %175 = vmatprep.subr.mxu0 %v71
    %176 = vmatpush1.msra.mxu0 %v70
    %177 = vmatprep.subr.mxu0 %v73
    %178 = vmatpush1.msra.mxu0 %v72
    %179 = vmatprep.subr.mxu0 %v75
    %180 = vmatpush1.msra.mxu0 %v74
    %181 = vmatprep.subr.mxu0 %v77
    %182 = vmatpush1.msra.mxu0 %v76
    %183 = vmatprep.subr.mxu0 %v79
    %184 = vmatpush1.msra.mxu0 %v78
    %185 = vmatprep.subr.mxu0 %v81
    %186 = vmatpush1.msra.mxu0 %v80
    %187 = vmatprep.subr.mxu0 %v83
    %188 = vmatpush1.msra.mxu0 %v82
    %189 = vmatprep.subr.mxu0 0.0
    %190 = vmatpush1.msra.mxu0 0.0
    %191 = vmatprep.subr.mxu0 0.0
    %192 = vmatpush1.msra.mxu0 0.0
    %193 = vmatprep.subr.mxu0 0.0
    %194 = vmatpush1.msra.mxu0 0.0
    %195 = vmatprep.subr.mxu0 0.0
    %196 = vmatpush1.msra.mxu0 0.0
    %197 = vmatprep.subr.mxu0 0.0
    %198 = vmatpush1.msra.mxu0 0.0
    %199 = vmatprep.subr.mxu0 0.0
    %200 = vmatpush1.msra.mxu0 0.0
    %201 = vmatprep.subr.mxu0 0.0
    %202 = vmatpush1.msra.mxu0 0.0
    %203 = vmatprep.subr.mxu0 0.0
    %204 = vmatpush1.msra.mxu0 0.0
    %205 = vmatprep.subr.mxu0 0.0
    %206 = vmatpush1.msra.mxu0 0.0
    %207 = vmatprep.subr.mxu0 0.0
    %208 = vmatpush1.msra.mxu0 0.0
    %209 = vmatprep.subr.mxu0 0.0
    %210 = vmatpush1.msra.mxu0 0.0
    %211 = vmatprep.subr.mxu0 0.0
    %212 = vmatpush1.msra.mxu0 0.0
    %213 = vmatprep.subr.mxu0 0.0
    %214 = vmatpush1.msra.mxu0 0.0
    %215 = vmatprep.subr.mxu0 0.0
    %216 = vmatpush1.msra.mxu0 0.0
    %217 = vmatprep.subr.mxu0 0.0
    %218 = vmatpush1.msra.mxu0 0.0
    %219 = vmatprep.subr.mxu0 0.0
    %220 = vmatpush1.msra.mxu0 0.0
    %221 = vmatprep.mubr.f32.mxu0 0.0
    %222 = vmatmul.mubr.f32.gmra.mrb[0].mxu0 %v156
    %v223 = vpop.f32.mrb[0].mxu0
    %v224 = vadd.f32 0.0, %v223
    %v225 = vpop.f32.mrb[0].mxu0
    %v226 = vadd.f32 0.0, %v225
    %227 = vdwg.mxu0
    %v228 = vmul.f32 %v152, %v152
    %v229 = vmul.f32 %v154, %v154
    %v230 = vadd.f32 %v228, %v229
    %231 = vadd.xlane.f32.xlu0 %v230
    %v232 = vpop.xlane.xlu0 %231
    %vm233 = vcmp.gt.f32.partialorder %v232, 0.0
    %v234 = vsel %vm233, %v232, 1.0
    %v235 = vrcp.pop %v234
    %v236 = vmul.f32 %v234, %v235
    %v237 = vsub.f32 2.0, %v236
    %v238 = vmul.f32 %v235, %v237
    %v239 = vmul.f32 %v230, %v238
    %v240 = vmul.f32 %v224, %v224
    %v241 = vmul.f32 %v226, %v226
    %v242 = vadd.f32 %v240, %v241
    %243 = vadd.xlane.f32.xlu0 %v242
    %v244 = vpop.xlane.xlu0 %243
    %vm245 = vcmp.gt.f32.partialorder %v244, 0.0
    %v246 = vsel %vm245, %v244, 1.0
    %v247 = vrcp.pop %v246
    %v248 = vmul.f32 %v246, %v247
    %v249 = vsub.f32 2.0, %v248
    %v250 = vmul.f32 %v247, %v249
    %v251 = vmul.f32 %v242, %v250
    %v252 = vsub.f32 %v239, %v251
    %v253 = vmul.f32 %v252, %v252
    %254 = vadd.xlane.f32.xlu0 %v253
    %v255 = vpop.xlane.xlu0 %254
    %v256 = vmul.f32 %v255, 0.06666667
    %vm257 = vcmask 64512
    %258 = vst.msk [vmem:[#allocation8] sm:$0xff] %vm257, %v256
    // Predicated region
    $region26: #{tpu_custom_call.1} parent=1 // pred_check
      _
    $region27: #{tpu_custom_call.1} parent=1 // pred_check_branch
      %260 = sbr.rel (0) target = $region29
    $region28: #{tpu_custom_call.1} parent=1 // pred_region
      %s262 = ssub.s32 128, 128
      %263 = vsyncadd [#allocation4], %s262
      %s265 = sshll.u32 [#allocation8], 4
      %s266 = int_to_ptr.vmem [resolvable:$true] %s265
      %268 = dma.vmem_to_hbm [thread:$0]  %s266, 128, %s3, [#allocation4]
    $region29: #{tpu_custom_call.1} parent=1 // pred_fallthru
      _
    // Predicated region
    $region30: #{tpu_custom_call.1} parent=1 // pred_check
      _
    $region31: #{tpu_custom_call.1} parent=1 // pred_check_branch
      %270 = sbr.rel (0) target = $region33
    $region32: #{tpu_custom_call.1} parent=1 // pred_region
      %271 = dma.done [#allocation4], 128
    $region33: #{tpu_custom_call.1} parent=1 // pred_fallthru
      _
    %272 = vsyncpa [#allocation3], 1
    %273 = vsyncpa [#allocation6], 1
    %274 = vsyncpa [#allocation4], 1

</llo_original>
